<compile_context>
chip_gen: v5e
topology: v5e:2x2
jax: 0.10.0
libtpu: 0.0.40
codegen_flags: <defaults>
</compile_context>

<pallas_src>
import functools
import math

import jax
import jax.numpy as jnp
import numpy as np
from jax.experimental import pallas as pl
from jax.experimental.pallas import tpu as pltpu

EPS = 1e-5  # PyTorch LayerNorm default eps


# ---------------------------------------------------------------------------
# small traced helpers (usable both inside kernels and in the pure-JAX ref)
# ---------------------------------------------------------------------------
def _ln(x, gamma, beta):
    mu = jnp.mean(x, axis=-1, keepdims=True)
    var = jnp.mean((x - mu) ** 2, axis=-1, keepdims=True)
    return (x - mu) * jax.lax.rsqrt(var + EPS) * gamma + beta


def _ln_norm(x):
    """LayerNorm without the affine (affine folded into downstream Linear)."""
    mu = jnp.mean(x, axis=-1, keepdims=True)
    xc = x - mu
    var = jnp.mean(xc * xc, axis=-1, keepdims=True)
    return xc * jax.lax.rsqrt(var + EPS)


def _prelu(x, a):
    return jnp.where(x >= 0, x, a * x)


# ---------------------------------------------------------------------------
# Kernel A: per-node precompute (row-tiled, "parallel")
#   pe_i      = edge @ We + be                 (N, E)   (i-side of pair diff)
#   pe_j      = edge @ We                      (N, E)   (j-side of pair diff)
#   row_term  = nf @ (W1a + W1c) + b1'         (N, 3E)
#   col_term  = nb @ W1c                       (N, 3E)
# where nf / nb are the node / neighbor embeddings (Linear->PReLU->LN).
# ---------------------------------------------------------------------------
def embed_kernel(node_ref, edge_ref,
                 wn_ref, bn_ref, an_ref, gn_ref, btn_ref,
                 wm_ref, bm_ref, am_ref, gm_ref, btm_ref,
                 we_ref, be_ref, w1ac_ref, b1_ref, w1c_ref,
                 pei_ref, pej_ref, rt_ref, ct_ref):
    x = node_ref[...]

    h = jnp.dot(x, wn_ref[...], preferred_element_type=jnp.float32) + bn_ref[...]
    nf = _ln(_prelu(h, an_ref[0, 0]), gn_ref[...], btn_ref[...])

    h = jnp.dot(x, wm_ref[...], preferred_element_type=jnp.float32) + bm_ref[...]
    nb = _ln(_prelu(h, am_ref[0, 0]), gm_ref[...], btm_ref[...])

    pe = jnp.dot(edge_ref[...], we_ref[...], preferred_element_type=jnp.float32)
    pej_ref[...] = pe
    pei_ref[...] = pe + be_ref[...]

    rt_ref[...] = jnp.dot(nf, w1ac_ref[...],
                          preferred_element_type=jnp.float32) + b1_ref[...]
    ct_ref[...] = jnp.dot(nb, w1c_ref[...],
                          preferred_element_type=jnp.float32)


# ---------------------------------------------------------------------------
# Kernel B: pairwise part + neighbor-axis accumulation + finalize
# grid = (row blocks, neighbor blocks); neighbor axis is the reduction axis.
# w1b_ref already carries the edge-LN gamma (row scaled); w2_ref carries the
# out-LN1 gamma; b2_ref = bt1@W2 + b2 (multiplied by N at finalize).
# ---------------------------------------------------------------------------
def pairwise_kernel(node_ref, pei_ref, pej_ref, rti_ref, ctj_ref,
                    ae_ref, a1_ref, w1b_ref, w2_ref, b2_ref,
                    gon_ref, bon_ref,
                    out_ref, acc_ref, *, n_total):
    j = pl.program_id(1)
    tm, e = pei_ref.shape
    tn = pej_ref.shape[0]
    e3 = rti_ref.shape[1]

    @pl.when(j == 0)
    def _():
        acc_ref[...] = jnp.zeros_like(acc_ref)

    # factored edge_embedding: (e_i - e_j)@We + be == pe_i(+be) - pe_j
    diff = pei_ref[...][:, None, :] - pej_ref[...][None, :, :]        # (tm,tn,E)
    xn = _ln_norm(_prelu(diff, ae_ref[0, 0]))                         # no affine

    # only the edge slice of the 3E->3E linear genuinely needs tm*tn rows
    hw = jnp.dot(xn.reshape(tm * tn, e), w1b_ref[...],
                 preferred_element_type=jnp.float32).reshape(tm, tn, e3)

    z = rti_ref[...][:, None, :] - ctj_ref[...][None, :, :] + hw
    zn = _ln_norm(_prelu(z, a1_ref[0, 0]))                            # (tm,tn,3E)

    acc_ref[...] += jnp.sum(zn, axis=1)                               # (tm, 3E)

    @pl.when(j == pl.num_programs(1) - 1)
    def _():
        # sum_j (LN1(z)@W2 + b2) == (sum_j zn)@(g1^T*W2) + N*(bt1@W2 + b2)
        y = (jnp.dot(acc_ref[...], w2_ref[...],
                     preferred_element_type=jnp.float32)
             + jnp.float32(n_total) * b2_ref[...]
             + node_ref[...])
        out_ref[...] = _ln(y, gon_ref[...], bon_ref[...]).astype(out_ref.dtype)


# ---------------------------------------------------------------------------
# wrapper
# ---------------------------------------------------------------------------
def _pick_tile(n, cap):
    """Largest tile <= cap that divides n and is a multiple of 8; else n."""
    if n <= cap:
        return n
    best = None
    t = 8
    while t <= cap:
        if n % t == 0:
            best = t
        t += 8
    return best if best is not None else n  # full-dim block is always legal


def crakn_conv_forward(node, edge, p, *, tile_m=None, tile_n=None):
    N, D = node.shape
    E = p["node"]["w"].shape[1]
    E3 = 3 * E

    pn, pm, pe_p, po, pon = p["node"], p["nbr"], p["edge"], p["out"], p["outn"]

    # split out.W1 into its three row blocks once, outside the kernels
    w1 = po["w1"]
    w1b = w1[E:2 * E, :]
    w1c = w1[2 * E:, :]
    w1ac = w1[:E, :] + w1c          # nfrep@W1a and the +nf part of fdiff@W1c

    # fold the edge-LN affine into W1b / the bias of row_term
    w1b_f = w1b * pe_p["g"].T                       # (E, 3E), row-scaled by ge
    b1_eff = po["b1"] + pe_p["bt"] @ w1b            # (1, 3E)

    # fold the out-LN1 affine into W2 / the final bias
    w2_eff = po["w2"] * po["g1"].T                  # (3E, D), row-scaled by g1
    b2_eff = po["bt1"] @ po["w2"] + po["b2"]        # (1, D); multiplied by N later

    # per-generation VMEM-aware tile cap (v7x has half the VMEM of v5e/v6e)
    try:
        vmem_bytes = int(pltpu.get_tpu_info().vmem_capacity_bytes)
    except Exception:  # pragma: no cover - conservative fallback
        vmem_bytes = 64 << 20
    per_pair_bytes = (E + 2 * E3) * 4               # live f32 per (i, j) pair
    cap = int(math.isqrt(max((vmem_bytes // 8) // per_pair_bytes, 64)))
    cap = max(8, min(cap, 512))

    tm = tile_m if tile_m is not None else _pick_tile(N, cap)
    tn = tile_n if tile_n is not None else _pick_tile(N, cap)
    tma = _pick_tile(N, 512)

    def smem():
        return pl.BlockSpec(memory_space=pltpu.MemorySpace.SMEM)

    # ---- Kernel A: per-node precompute ----------------------------------
    def full_a(shape):
        return pl.BlockSpec(shape, lambda i: (0,) * len(shape))

    def row_a(shape):
        return pl.BlockSpec(shape, lambda i: (i,) + (0,) * (len(shape) - 1))

    pei_arr, pej_arr, row_term, col_term = pl.pallas_call(
        embed_kernel,
        out_shape=(jax.ShapeDtypeStruct((N, E), jnp.float32),
                   jax.ShapeDtypeStruct((N, E), jnp.float32),
                   jax.ShapeDtypeStruct((N, E3), jnp.float32),
                   jax.ShapeDtypeStruct((N, E3), jnp.float32)),
        grid=(N // tma,),
        in_specs=[row_a((tma, D)), row_a((tma, D)),
                  full_a((D, E)), full_a((1, E)), smem(), full_a((1, E)), full_a((1, E)),
                  full_a((D, E)), full_a((1, E)), smem(), full_a((1, E)), full_a((1, E)),
                  full_a((D, E)), full_a((1, E)),
                  full_a((E, E3)), full_a((1, E3)), full_a((E, E3))],
        out_specs=(row_a((tma, E)), row_a((tma, E)),
                   row_a((tma, E3)), row_a((tma, E3))),
        compiler_params=pltpu.CompilerParams(dimension_semantics=("parallel",)),
    )(node, edge,
      pn["w"], pn["b"], pn["a"], pn["g"], pn["bt"],
      pm["w"], pm["b"], pm["a"], pm["g"], pm["bt"],
      pe_p["w"], pe_p["b"],
      w1ac, b1_eff, w1c)

    # ---- Kernel B: pairwise + neighbor-axis reduction --------------------
    def row_i(shape):
        return pl.BlockSpec(shape, lambda i, j: (i,) + (0,) * (len(shape) - 1))

    def row_j(shape):
        return pl.BlockSpec(shape, lambda i, j: (j,) + (0,) * (len(shape) - 1))

    def full_b(shape):
        return pl.BlockSpec(shape, lambda i, j: (0,) * len(shape))

    out_nodes = pl.pallas_call(
        functools.partial(pairwise_kernel, n_total=N),
        out_shape=jax.ShapeDtypeStruct((N, D), jnp.float32),
        grid=(N // tm, N // tn),
        in_specs=[row_i((tm, D)),                      # node_features block
                  row_i((tm, E)), row_j((tn, E)),      # pe_i / pe_j
                  row_i((tm, E3)), row_j((tn, E3)),    # row_term / col_term
                  smem(), smem(),                      # PReLU scalars (edge, out1)
                  full_b((E, E3)),                     # W1b (edge-LN gamma folded)
                  full_b((E3, D)), full_b((1, D)),     # W2 (g1 folded), b2_eff
                  full_b((1, D)), full_b((1, D))],     # out_norm gamma / beta
        out_specs=row_i((tm, D)),
        scratch_shapes=[pltpu.VMEM((tm, E3), jnp.float32)],
        compiler_params=pltpu.CompilerParams(
            dimension_semantics=("parallel", "arbitrary"),
            vmem_limit_bytes=int(vmem_bytes * 3 // 4)),
    )(node, pei_arr, pej_arr, row_term, col_term,
      pe_p["a"], po["a1"],
      w1b_f, w2_eff, b2_eff,
      pon["g"], pon["bt"])

    return out_nodes, edge


# ---------------------------------------------------------------------------
# pure-JAX reference (mirrors the PyTorch forward exactly)
# ---------------------------------------------------------------------------
def reference(node, edge, p):
    def seq(x, q):
        h = x @ q["w"] + q["b"]
        h = _prelu(h, q["a"][0, 0])
        return _ln(h, q["g"], q["bt"])

    nf = seq(node, p["node"])
    nb = seq(node, p["nbr"])
    fdiff = nf[:, None, :] - nb[None, :, :]
    amd = seq(edge[:, None, :] - edge[None, :, :], p["edge"])
    nfrep = jnp.broadcast_to(nf[:, None, :], fdiff.shape)
    allf = jnp.concatenate([nfrep, amd, fdiff], axis=-1)

    po = p["out"]
    u = allf @ po["w1"] + po["b1"]
    u = _prelu(u, po["a1"][0, 0])
    u = _ln(u, po["g1"], po["bt1"])
    upd = u @ po["w2"] + po["b2"]

    y = node + jnp.sum(upd, axis=1)
    return _ln(y, p["outn"]["g"], p["outn"]["bt"]), edge


# ---------------------------------------------------------------------------
# deterministic parameter init (synthetic; shapes follow CrAKNConv.__init__)
# ---------------------------------------------------------------------------
def init_params(key, D, E):
    ks = jax.random.split(key, 9)

    def lin(k, fan_in, fan_out):
        kw, kb = jax.random.split(k)
        lim = 1.0 / np.sqrt(fan_in)
        w = jax.random.uniform(kw, (fan_in, fan_out), jnp.float32, -lim, lim)
        b = jax.random.uniform(kb, (1, fan_out), jnp.float32, -lim, lim)
        return w, b

    def emb(k, fan_in, fan_out):
        kl, kg, kb2 = jax.random.split(k, 3)
        w, b = lin(kl, fan_in, fan_out)
        return dict(w=w, b=b,
                    a=jnp.full((1, 1), 0.25, jnp.float32),  # PReLU init
                    g=1.0 + 0.1 * jax.random.normal(kg, (1, fan_out), jnp.float32),
                    bt=0.1 * jax.random.normal(kb2, (1, fan_out), jnp.float32))

    p = {
        "node": emb(ks[0], D, E),
        "nbr": emb(ks[1], D, E),
        "edge": emb(ks[2], D, E),
    }
    w1, b1 = lin(ks[3], 3 * E, 3 * E)
    w2, b2 = lin(ks[4], 3 * E, D)
    p["out"] = dict(w1=w1, b1=b1,
                    a1=jnp.full((1, 1), 0.25, jnp.float32),
                    g1=1.0 + 0.1 * jax.random.normal(ks[5], (1, 3 * E), jnp.float32),
                    bt1=0.1 * jax.random.normal(ks[6], (1, 3 * E), jnp.float32),
                    w2=w2, b2=b2)
    p["outn"] = dict(g=1.0 + 0.1 * jax.random.normal(ks[7], (1, D), jnp.float32),
                     bt=0.1 * jax.random.normal(ks[8], (1, D), jnp.float32))
    return p


if __name__ == "__main__":
    key = jax.random.PRNGKey(0)

    # ---- test 1: small, single-block grid --------------------------------
    N, D, E = 8, 16, 32
    kp, kn, ke = jax.random.split(key, 3)
    params = init_params(kp, D, E)
    node_features = jax.random.normal(kn, (N, D), jnp.float32)
    edge_features = jax.random.normal(ke, (N, D), jnp.float32)

    out_nodes, out_edges = crakn_conv_forward(node_features, edge_features, params)
    jax.block_until_ready(out_nodes)

    ref_nodes, ref_edges = reference(node_features, edge_features, params)
    np.testing.assert_allclose(np.asarray(out_nodes), np.asarray(ref_nodes),
                               rtol=5e-4, atol=5e-4)
    np.testing.assert_allclose(np.asarray(out_edges), np.asarray(ref_edges),
                               rtol=0, atol=0)

    # ---- test 2: multi-block grid (exercises the neighbor-axis accumulator)
    N2 = 32
    kp2, kn2, ke2 = jax.random.split(jax.random.PRNGKey(1), 3)
    params2 = init_params(kp2, D, E)
    node2 = jax.random.normal(kn2, (N2, D), jnp.float32)
    edge2 = jax.random.normal(ke2, (N2, D), jnp.float32)

    out2, _ = crakn_conv_forward(node2, edge2, params2, tile_m=8, tile_n=8)
    jax.block_until_ready(out2)
    ref2, _ = reference(node2, edge2, params2)
    np.testing.assert_allclose(np.asarray(out2), np.asarray(ref2),
                               rtol=5e-4, atol=5e-4)

    print("KERNEL_OK")
</pallas_src>

<mosaic_0001>
module attributes {stable_mosaic.version = 11 : i64} {
  func.func @embed_kernel(%arg0: i32, %arg1: memref<8x16xf32, #tpu.memory_space<vmem>>, %arg2: memref<8x16xf32, #tpu.memory_space<vmem>>, %arg3: memref<16x32xf32, #tpu.memory_space<vmem>>, %arg4: memref<1x32xf32, #tpu.memory_space<vmem>>, %arg5: memref<1x1xf32, #tpu.memory_space<smem>>, %arg6: memref<1x32xf32, #tpu.memory_space<vmem>>, %arg7: memref<1x32xf32, #tpu.memory_space<vmem>>, %arg8: memref<16x32xf32, #tpu.memory_space<vmem>>, %arg9: memref<1x32xf32, #tpu.memory_space<vmem>>, %arg10: memref<1x1xf32, #tpu.memory_space<smem>>, %arg11: memref<1x32xf32, #tpu.memory_space<vmem>>, %arg12: memref<1x32xf32, #tpu.memory_space<vmem>>, %arg13: memref<16x32xf32, #tpu.memory_space<vmem>>, %arg14: memref<1x32xf32, #tpu.memory_space<vmem>>, %arg15: memref<32x96xf32, #tpu.memory_space<vmem>>, %arg16: memref<1x96xf32, #tpu.memory_space<vmem>>, %arg17: memref<32x96xf32, #tpu.memory_space<vmem>>, %arg18: memref<8x32xf32, #tpu.memory_space<vmem>>, %arg19: memref<8x32xf32, #tpu.memory_space<vmem>>, %arg20: memref<8x96xf32, #tpu.memory_space<vmem>>, %arg21: memref<8x96xf32, #tpu.memory_space<vmem>>) attributes {dimension_semantics = [#tpu.dimension_semantics<parallel>], iteration_bounds = array<i64: 1>, scalar_prefetch = 0 : i64, scratch_operands = 0 : i64, tpu.core_type = #tpu.core_type<tc>, window_params = [{transform_indices = @transform_0, window_bounds = array<i64: 8, 16>}, {transform_indices = @transform_1, window_bounds = array<i64: 8, 16>}, {pipeline_mode = #tpu.pipeline_mode<synchronous>, transform_indices = @transform_2, window_bounds = array<i64: 16, 32>}, {pipeline_mode = #tpu.pipeline_mode<synchronous>, transform_indices = @transform_3, window_bounds = array<i64: 1, 32>}, {transform_indices = @transform_4, window_bounds = array<i64: 1, 1>}, {pipeline_mode = #tpu.pipeline_mode<synchronous>, transform_indices = @transform_5, window_bounds = array<i64: 1, 32>}, {pipeline_mode = #tpu.pipeline_mode<synchronous>, transform_indices = @transform_6, window_bounds = array<i64: 1, 32>}, {pipeline_mode = #tpu.pipeline_mode<synchronous>, transform_indices = @transform_7, window_bounds = array<i64: 16, 32>}, {pipeline_mode = #tpu.pipeline_mode<synchronous>, transform_indices = @transform_8, window_bounds = array<i64: 1, 32>}, {transform_indices = @transform_9, window_bounds = array<i64: 1, 1>}, {pipeline_mode = #tpu.pipeline_mode<synchronous>, transform_indices = @transform_10, window_bounds = array<i64: 1, 32>}, {pipeline_mode = #tpu.pipeline_mode<synchronous>, transform_indices = @transform_11, window_bounds = array<i64: 1, 32>}, {pipeline_mode = #tpu.pipeline_mode<synchronous>, transform_indices = @transform_12, window_bounds = array<i64: 16, 32>}, {pipeline_mode = #tpu.pipeline_mode<synchronous>, transform_indices = @transform_13, window_bounds = array<i64: 1, 32>}, {pipeline_mode = #tpu.pipeline_mode<synchronous>, transform_indices = @transform_14, window_bounds = array<i64: 32, 96>}, {pipeline_mode = #tpu.pipeline_mode<synchronous>, transform_indices = @transform_15, window_bounds = array<i64: 1, 96>}, {pipeline_mode = #tpu.pipeline_mode<synchronous>, transform_indices = @transform_16, window_bounds = array<i64: 32, 96>}, {transform_indices = @transform_17, window_bounds = array<i64: 8, 32>}, {transform_indices = @transform_18, window_bounds = array<i64: 8, 32>}, {transform_indices = @transform_19, window_bounds = array<i64: 8, 96>}, {transform_indices = @transform_20, window_bounds = array<i64: 8, 96>}]} {
    %c0 = arith.constant 0 : index
    %c0_0 = arith.constant 0 : index
    %0 = vector.load %arg1[%c0, %c0_0] : memref<8x16xf32, #tpu.memory_space<vmem>>, vector<8x16xf32>
    %c0_1 = arith.constant 0 : index
    %c0_2 = arith.constant 0 : index
    %1 = vector.load %arg3[%c0_1, %c0_2] : memref<16x32xf32, #tpu.memory_space<vmem>>, vector<16x32xf32>
    %cst = arith.constant dense<0.000000e+00> : vector<8x32xf32>
    %2 = tpu.matmul %0, %1, %cst {dimension_numbers = #tpu.dot_dimension_numbers<[1], [0], [0], [1], [0, 0, 1, 1], [], []>} : vector<8x16xf32>, vector<16x32xf32>, vector<8x32xf32> -> vector<8x32xf32>
    %c0_3 = arith.constant 0 : index
    %c0_4 = arith.constant 0 : index
    %3 = vector.load %arg4[%c0_3, %c0_4] : memref<1x32xf32, #tpu.memory_space<vmem>>, vector<1x32xf32>
    %4 = vector.broadcast %3 : vector<1x32xf32> to vector<8x32xf32>
    %5 = arith.addf %2, %4 : vector<8x32xf32>
    %c0_5 = arith.constant 0 : index
    %c0_6 = arith.constant 0 : index
    %6 = memref.load %arg5[%c0_5, %c0_6] : memref<1x1xf32, #tpu.memory_space<smem>>
    %cst_7 = arith.constant 0.000000e+00 : f32
    %7 = vector.broadcast %cst_7 : f32 to vector<8x32xf32>
    %8 = arith.cmpf oge, %5, %7 : vector<8x32xf32>
    %9 = vector.broadcast %6 : f32 to vector<8x32xf32>
    %10 = arith.mulf %9, %5 : vector<8x32xf32>
    %11 = arith.select %8, %5, %10 : vector<8x32xi1>, vector<8x32xf32>
    %c0_8 = arith.constant 0 : index
    %c0_9 = arith.constant 0 : index
    %12 = vector.load %arg6[%c0_8, %c0_9] : memref<1x32xf32, #tpu.memory_space<vmem>>, vector<1x32xf32>
    %c0_10 = arith.constant 0 : index
    %c0_11 = arith.constant 0 : index
    %13 = vector.load %arg7[%c0_10, %c0_11] : memref<1x32xf32, #tpu.memory_space<vmem>>, vector<1x32xf32>
    %cst_12 = arith.constant dense<0.000000e+00> : vector<8xf32>
    %14 = vector.multi_reduction <add>, %11, %cst_12 [1] : vector<8x32xf32> to vector<8xf32>
    %15 = vector.shape_cast %14 : vector<8xf32> to vector<8x1xf32>
    %cst_13 = arith.constant 3.200000e+01 : f32
    %16 = vector.broadcast %cst_13 : f32 to vector<8x1xf32>
    %17 = arith.divf %15, %16 : vector<8x1xf32>
    %18 = vector.broadcast %17 : vector<8x1xf32> to vector<8x32xf32>
    %19 = arith.subf %11, %18 : vector<8x32xf32>
    %20 = arith.mulf %19, %19 : vector<8x32xf32>
    %cst_14 = arith.constant dense<0.000000e+00> : vector<8xf32>
    %21 = vector.multi_reduction <add>, %20, %cst_14 [1] : vector<8x32xf32> to vector<8xf32>
    %22 = vector.shape_cast %21 : vector<8xf32> to vector<8x1xf32>
    %cst_15 = arith.constant 3.200000e+01 : f32
    %23 = vector.broadcast %cst_15 : f32 to vector<8x1xf32>
    %24 = arith.divf %22, %23 : vector<8x1xf32>
    %25 = vector.broadcast %17 : vector<8x1xf32> to vector<8x32xf32>
    %26 = arith.subf %11, %25 : vector<8x32xf32>
    %cst_16 = arith.constant 9.99999974E-6 : f32
    %27 = vector.broadcast %cst_16 : f32 to vector<8x1xf32>
    %28 = arith.addf %24, %27 : vector<8x1xf32>
    %29 = math.rsqrt %28 : vector<8x1xf32>
    %30 = vector.broadcast %29 : vector<8x1xf32> to vector<8x32xf32>
    %31 = arith.mulf %26, %30 : vector<8x32xf32>
    %32 = vector.broadcast %12 : vector<1x32xf32> to vector<8x32xf32>
    %33 = arith.mulf %31, %32 : vector<8x32xf32>
    %34 = vector.broadcast %13 : vector<1x32xf32> to vector<8x32xf32>
    %35 = arith.addf %33, %34 : vector<8x32xf32>
    %c0_17 = arith.constant 0 : index
    %c0_18 = arith.constant 0 : index
    %36 = vector.load %arg8[%c0_17, %c0_18] : memref<16x32xf32, #tpu.memory_space<vmem>>, vector<16x32xf32>
    %cst_19 = arith.constant dense<0.000000e+00> : vector<8x32xf32>
    %37 = tpu.matmul %0, %36, %cst_19 {dimension_numbers = #tpu.dot_dimension_numbers<[1], [0], [0], [1], [0, 0, 1, 1], [], []>} : vector<8x16xf32>, vector<16x32xf32>, vector<8x32xf32> -> vector<8x32xf32>
    %c0_20 = arith.constant 0 : index
    %c0_21 = arith.constant 0 : index
    %38 = vector.load %arg9[%c0_20, %c0_21] : memref<1x32xf32, #tpu.memory_space<vmem>>, vector<1x32xf32>
    %39 = vector.broadcast %38 : vector<1x32xf32> to vector<8x32xf32>
    %40 = arith.addf %37, %39 : vector<8x32xf32>
    %c0_22 = arith.constant 0 : index
    %c0_23 = arith.constant 0 : index
    %41 = memref.load %arg10[%c0_22, %c0_23] : memref<1x1xf32, #tpu.memory_space<smem>>
    %cst_24 = arith.constant 0.000000e+00 : f32
    %42 = vector.broadcast %cst_24 : f32 to vector<8x32xf32>
    %43 = arith.cmpf oge, %40, %42 : vector<8x32xf32>
    %44 = vector.broadcast %41 : f32 to vector<8x32xf32>
    %45 = arith.mulf %44, %40 : vector<8x32xf32>
    %46 = arith.select %43, %40, %45 : vector<8x32xi1>, vector<8x32xf32>
    %c0_25 = arith.constant 0 : index
    %c0_26 = arith.constant 0 : index
    %47 = vector.load %arg11[%c0_25, %c0_26] : memref<1x32xf32, #tpu.memory_space<vmem>>, vector<1x32xf32>
    %c0_27 = arith.constant 0 : index
    %c0_28 = arith.constant 0 : index
    %48 = vector.load %arg12[%c0_27, %c0_28] : memref<1x32xf32, #tpu.memory_space<vmem>>, vector<1x32xf32>
    %cst_29 = arith.constant dense<0.000000e+00> : vector<8xf32>
    %49 = vector.multi_reduction <add>, %46, %cst_29 [1] : vector<8x32xf32> to vector<8xf32>
    %50 = vector.shape_cast %49 : vector<8xf32> to vector<8x1xf32>
    %cst_30 = arith.constant 3.200000e+01 : f32
    %51 = vector.broadcast %cst_30 : f32 to vector<8x1xf32>
    %52 = arith.divf %50, %51 : vector<8x1xf32>
    %53 = vector.broadcast %52 : vector<8x1xf32> to vector<8x32xf32>
    %54 = arith.subf %46, %53 : vector<8x32xf32>
    %55 = arith.mulf %54, %54 : vector<8x32xf32>
    %cst_31 = arith.constant dense<0.000000e+00> : vector<8xf32>
    %56 = vector.multi_reduction <add>, %55, %cst_31 [1] : vector<8x32xf32> to vector<8xf32>
    %57 = vector.shape_cast %56 : vector<8xf32> to vector<8x1xf32>
    %cst_32 = arith.constant 3.200000e+01 : f32
    %58 = vector.broadcast %cst_32 : f32 to vector<8x1xf32>
    %59 = arith.divf %57, %58 : vector<8x1xf32>
    %60 = vector.broadcast %52 : vector<8x1xf32> to vector<8x32xf32>
    %61 = arith.subf %46, %60 : vector<8x32xf32>
    %cst_33 = arith.constant 9.99999974E-6 : f32
    %62 = vector.broadcast %cst_33 : f32 to vector<8x1xf32>
    %63 = arith.addf %59, %62 : vector<8x1xf32>
    %64 = math.rsqrt %63 : vector<8x1xf32>
    %65 = vector.broadcast %64 : vector<8x1xf32> to vector<8x32xf32>
    %66 = arith.mulf %61, %65 : vector<8x32xf32>
    %67 = vector.broadcast %47 : vector<1x32xf32> to vector<8x32xf32>
    %68 = arith.mulf %66, %67 : vector<8x32xf32>
    %69 = vector.broadcast %48 : vector<1x32xf32> to vector<8x32xf32>
    %70 = arith.addf %68, %69 : vector<8x32xf32>
    %c0_34 = arith.constant 0 : index
    %c0_35 = arith.constant 0 : index
    %71 = vector.load %arg2[%c0_34, %c0_35] : memref<8x16xf32, #tpu.memory_space<vmem>>, vector<8x16xf32>
    %c0_36 = arith.constant 0 : index
    %c0_37 = arith.constant 0 : index
    %72 = vector.load %arg13[%c0_36, %c0_37] : memref<16x32xf32, #tpu.memory_space<vmem>>, vector<16x32xf32>
    %cst_38 = arith.constant dense<0.000000e+00> : vector<8x32xf32>
    %73 = tpu.matmul %71, %72, %cst_38 {dimension_numbers = #tpu.dot_dimension_numbers<[1], [0], [0], [1], [0, 0, 1, 1], [], []>} : vector<8x16xf32>, vector<16x32xf32>, vector<8x32xf32> -> vector<8x32xf32>
    %c0_39 = arith.constant 0 : index
    %c0_40 = arith.constant 0 : index
    %74 = vector.load %arg19[%c0_39, %c0_40] : memref<8x32xf32, #tpu.memory_space<vmem>>, vector<8x32xf32>
    tpu.vector_store %arg19[%c0_39, %c0_40], %73 {strides = array<i32>} : memref<8x32xf32, #tpu.memory_space<vmem>>, vector<8x32xf32>,
    %c0_41 = arith.constant 0 : index
    %c0_42 = arith.constant 0 : index
    %75 = vector.load %arg14[%c0_41, %c0_42] : memref<1x32xf32, #tpu.memory_space<vmem>>, vector<1x32xf32>
    %76 = vector.broadcast %75 : vector<1x32xf32> to vector<8x32xf32>
    %77 = arith.addf %73, %76 : vector<8x32xf32>
    %c0_43 = arith.constant 0 : index
    %c0_44 = arith.constant 0 : index
    %78 = vector.load %arg18[%c0_43, %c0_44] : memref<8x32xf32, #tpu.memory_space<vmem>>, vector<8x32xf32>
    tpu.vector_store %arg18[%c0_43, %c0_44], %77 {strides = array<i32>} : memref<8x32xf32, #tpu.memory_space<vmem>>, vector<8x32xf32>,
    %c0_45 = arith.constant 0 : index
    %c0_46 = arith.constant 0 : index
    %79 = vector.load %arg15[%c0_45, %c0_46] : memref<32x96xf32, #tpu.memory_space<vmem>>, vector<32x96xf32>
    %cst_47 = arith.constant dense<0.000000e+00> : vector<8x96xf32>
    %80 = tpu.matmul %35, %79, %cst_47 {dimension_numbers = #tpu.dot_dimension_numbers<[1], [0], [0], [1], [0, 0, 1, 1], [], []>} : vector<8x32xf32>, vector<32x96xf32>, vector<8x96xf32> -> vector<8x96xf32>
    %c0_48 = arith.constant 0 : index
    %c0_49 = arith.constant 0 : index
    %81 = vector.load %arg16[%c0_48, %c0_49] : memref<1x96xf32, #tpu.memory_space<vmem>>, vector<1x96xf32>
    %82 = vector.broadcast %81 : vector<1x96xf32> to vector<8x96xf32>
    %83 = arith.addf %80, %82 : vector<8x96xf32>
    %c0_50 = arith.constant 0 : index
    %c0_51 = arith.constant 0 : index
    %84 = vector.load %arg20[%c0_50, %c0_51] : memref<8x96xf32, #tpu.memory_space<vmem>>, vector<8x96xf32>
    tpu.vector_store %arg20[%c0_50, %c0_51], %83 {strides = array<i32>} : memref<8x96xf32, #tpu.memory_space<vmem>>, vector<8x96xf32>,
    %c0_52 = arith.constant 0 : index
    %c0_53 = arith.constant 0 : index
    %85 = vector.load %arg17[%c0_52, %c0_53] : memref<32x96xf32, #tpu.memory_space<vmem>>, vector<32x96xf32>
    %cst_54 = arith.constant dense<0.000000e+00> : vector<8x96xf32>
    %86 = tpu.matmul %70, %85, %cst_54 {dimension_numbers = #tpu.dot_dimension_numbers<[1], [0], [0], [1], [0, 0, 1, 1], [], []>} : vector<8x32xf32>, vector<32x96xf32>, vector<8x96xf32> -> vector<8x96xf32>
    %c0_55 = arith.constant 0 : index
    %c0_56 = arith.constant 0 : index
    %87 = vector.load %arg21[%c0_55, %c0_56] : memref<8x96xf32, #tpu.memory_space<vmem>>, vector<8x96xf32>
    tpu.vector_store %arg21[%c0_55, %c0_56], %86 {strides = array<i32>} : memref<8x96xf32, #tpu.memory_space<vmem>>, vector<8x96xf32>,
    return
  }
  func.func @transform_0(%arg0: i32) -> (i32, i32) {
    %c0_i32 = arith.constant 0 : i32
    %c0_i32_0 = arith.constant 0 : i32
    return %arg0, %c0_i32 : i32, i32
  }
  func.func @transform_1(%arg0: i32) -> (i32, i32) {
    %c0_i32 = arith.constant 0 : i32
    %c0_i32_0 = arith.constant 0 : i32
    return %arg0, %c0_i32 : i32, i32
  }
  func.func @transform_2(%arg0: i32) -> (i32, i32) {
    %c0_i32 = arith.constant 0 : i32
    %c0_i32_0 = arith.constant 0 : i32
    %c0_i32_1 = arith.constant 0 : i32
    return %c0_i32, %c0_i32_0 : i32, i32
  }
  func.func @transform_3(%arg0: i32) -> (i32, i32) {
    %c0_i32 = arith.constant 0 : i32
    %c0_i32_0 = arith.constant 0 : i32
    %c0_i32_1 = arith.constant 0 : i32
    return %c0_i32, %c0_i32_0 : i32, i32
  }
  func.func @transform_4(%arg0: i32) -> (i32, i32) {
    %c0_i32 = arith.constant 0 : i32
    %c0_i32_0 = arith.constant 0 : i32
    %c0_i32_1 = arith.constant 0 : i32
    return %c0_i32, %c0_i32_0 : i32, i32
  }
  func.func @transform_5(%arg0: i32) -> (i32, i32) {
    %c0_i32 = arith.constant 0 : i32
    %c0_i32_0 = arith.constant 0 : i32
    %c0_i32_1 = arith.constant 0 : i32
    return %c0_i32, %c0_i32_0 : i32, i32
  }
  func.func @transform_6(%arg0: i32) -> (i32, i32) {
    %c0_i32 = arith.constant 0 : i32
    %c0_i32_0 = arith.constant 0 : i32
    %c0_i32_1 = arith.constant 0 : i32
    return %c0_i32, %c0_i32_0 : i32, i32
  }
  func.func @transform_7(%arg0: i32) -> (i32, i32) {
    %c0_i32 = arith.constant 0 : i32
    %c0_i32_0 = arith.constant 0 : i32
    %c0_i32_1 = arith.constant 0 : i32
    return %c0_i32, %c0_i32_0 : i32, i32
  }
  func.func @transform_8(%arg0: i32) -> (i32, i32) {
    %c0_i32 = arith.constant 0 : i32
    %c0_i32_0 = arith.constant 0 : i32
    %c0_i32_1 = arith.constant 0 : i32
    return %c0_i32, %c0_i32_0 : i32, i32
  }
  func.func @transform_9(%arg0: i32) -> (i32, i32) {
    %c0_i32 = arith.constant 0 : i32
    %c0_i32_0 = arith.constant 0 : i32
    %c0_i32_1 = arith.constant 0 : i32
    return %c0_i32, %c0_i32_0 : i32, i32
  }
  func.func @transform_10(%arg0: i32) -> (i32, i32) {
    %c0_i32 = arith.constant 0 : i32
    %c0_i32_0 = arith.constant 0 : i32
    %c0_i32_1 = arith.constant 0 : i32
    return %c0_i32, %c0_i32_0 : i32, i32
  }
  func.func @transform_11(%arg0: i32) -> (i32, i32) {
    %c0_i32 = arith.constant 0 : i32
    %c0_i32_0 = arith.constant 0 : i32
    %c0_i32_1 = arith.constant 0 : i32
    return %c0_i32, %c0_i32_0 : i32, i32
  }
  func.func @transform_12(%arg0: i32) -> (i32, i32) {
    %c0_i32 = arith.constant 0 : i32
    %c0_i32_0 = arith.constant 0 : i32
    %c0_i32_1 = arith.constant 0 : i32
    return %c0_i32, %c0_i32_0 : i32, i32
  }
  func.func @transform_13(%arg0: i32) -> (i32, i32) {
    %c0_i32 = arith.constant 0 : i32
    %c0_i32_0 = arith.constant 0 : i32
    %c0_i32_1 = arith.constant 0 : i32
    return %c0_i32, %c0_i32_0 : i32, i32
  }
  func.func @transform_14(%arg0: i32) -> (i32, i32) {
    %c0_i32 = arith.constant 0 : i32
    %c0_i32_0 = arith.constant 0 : i32
    %c0_i32_1 = arith.constant 0 : i32
    return %c0_i32, %c0_i32_0 : i32, i32
  }
  func.func @transform_15(%arg0: i32) -> (i32, i32) {
    %c0_i32 = arith.constant 0 : i32
    %c0_i32_0 = arith.constant 0 : i32
    %c0_i32_1 = arith.constant 0 : i32
    return %c0_i32, %c0_i32_0 : i32, i32
  }
  func.func @transform_16(%arg0: i32) -> (i32, i32) {
    %c0_i32 = arith.constant 0 : i32
    %c0_i32_0 = arith.constant 0 : i32
    %c0_i32_1 = arith.constant 0 : i32
    return %c0_i32, %c0_i32_0 : i32, i32
  }
  func.func @transform_17(%arg0: i32) -> (i32, i32) {
    %c0_i32 = arith.constant 0 : i32
    %c0_i32_0 = arith.constant 0 : i32
    return %arg0, %c0_i32 : i32, i32
  }
  func.func @transform_18(%arg0: i32) -> (i32, i32) {
    %c0_i32 = arith.constant 0 : i32
    %c0_i32_0 = arith.constant 0 : i32
    return %arg0, %c0_i32 : i32, i32
  }
  func.func @transform_19(%arg0: i32) -> (i32, i32) {
    %c0_i32 = arith.constant 0 : i32
    %c0_i32_0 = arith.constant 0 : i32
    return %arg0, %c0_i32 : i32, i32
  }
  func.func @transform_20(%arg0: i32) -> (i32, i32) {
    %c0_i32 = arith.constant 0 : i32
    %c0_i32_0 = arith.constant 0 : i32
    return %arg0, %c0_i32 : i32, i32
  }
}

</mosaic_0001>

<llo_original>
// kernel: tpu_custom_call.1
$region0: #{tpu_custom_call.1}
  #allocation0 [shape = 'u32[]', space=smem, size = 0x4, offset = 0x4, fixed_abs, tag = 'smem constant byte address 0x4 - core index']
  #allocation1 [shape = 'u32[72,128]{1,0:T(1,128)}', space=vmem, size = 0x9000, scoped, tag = 'internal scratch']
  #allocation2 [shape = 'f32[1,1]{1,0:T(1,128)S(6)}', space=smem, size = 0x200, scoped, tag = 'scoped memory for tpu_custom_call.1']
  #allocation3 [shape = 'f32[1,1]{1,0:T(1,128)S(6)}', space=smem, size = 0x200, scoped, tag = 'scoped memory for tpu_custom_call.1']
  %s0 = inlined_call_operand.hbm [shape: f32[8,16], index: 0, kind: input, shape index: {}]
  %s1 = inlined_call_operand.hbm [shape: f32[8,16], index: 1, kind: input, shape index: {}]
  %s2 = inlined_call_operand.hbm [shape: f32[16,32], index: 2, kind: input, shape index: {}]
  %s3 = inlined_call_operand.vmem [shape: f32[1,32], index: 3, kind: input, shape index: {}]
  %s4 = inlined_call_operand.<no memory space> [shape: f32[1,1], index: 4, kind: input, shape index: {}]
  %s5 = inlined_call_operand.vmem [shape: f32[1,32], index: 5, kind: input, shape index: {}]
  %s6 = inlined_call_operand.vmem [shape: f32[1,32], index: 6, kind: input, shape index: {}]
  %s7 = inlined_call_operand.hbm [shape: f32[16,32], index: 7, kind: input, shape index: {}]
  %s8 = inlined_call_operand.vmem [shape: f32[1,32], index: 8, kind: input, shape index: {}]
  %s9 = inlined_call_operand.<no memory space> [shape: f32[1,1], index: 9, kind: input, shape index: {}]
  %s10 = inlined_call_operand.vmem [shape: f32[1,32], index: 10, kind: input, shape index: {}]
  %s11 = inlined_call_operand.vmem [shape: f32[1,32], index: 11, kind: input, shape index: {}]
  %s12 = inlined_call_operand.hbm [shape: f32[16,32], index: 12, kind: input, shape index: {}]
  %s13 = inlined_call_operand.vmem [shape: f32[1,32], index: 13, kind: input, shape index: {}]
  %s14 = inlined_call_operand.hbm [shape: f32[32,96], index: 14, kind: input, shape index: {}]
  %s15 = inlined_call_operand.vmem [shape: f32[1,96], index: 15, kind: input, shape index: {}]
  %s16 = inlined_call_operand.hbm [shape: f32[32,96], index: 16, kind: input, shape index: {}]
  %s17 = inlined_call_operand.hbm [shape: f32[8,32], index: 17, kind: output, shape index: {0}]
  %s18 = inlined_call_operand.hbm [shape: f32[8,32], index: 18, kind: output, shape index: {1}]
  %s19 = inlined_call_operand.hbm [shape: f32[8,96], index: 19, kind: output, shape index: {2}]
  %s20 = inlined_call_operand.hbm [shape: f32[8,96], index: 20, kind: output, shape index: {3}]
  %21 = xla_tuple %s17, %s18, %s19, %s20
  %s22 = sld [smem:[#allocation0]]
  $region130: #{tpu_custom_call.1} parent=0
    _
  %s24 = ssub.s32 1, %s22
  %s25 = scalar_select 0, %s24, %s22
  %26 = sst [smem:[#allocation2]] %s4
  %27 = sst [smem:[#allocation3]] %s9
  $region1: #{tpu_custom_call.1} parent=0
    #allocation4 [shape = 'u8[4096]{0}', space=vmem, size = 0x1000, scoped, tag = 'input window, operand 0, single buffered']
    #allocation5 [shape = 's32[1]{0}', space=sflag, size = 0x4, scoped, tag = 'scoped memory for tpu_custom_call.1']
    #allocation6 [shape = 's32[1]{0}', space=sflag, size = 0x4, scoped, tag = 'scoped memory for tpu_custom_call.1']
    #allocation7 [shape = 'u8[4096]{0}', space=vmem, size = 0x1000, scoped, tag = 'input window, operand 1, single buffered']
    #allocation8 [shape = 's32[1]{0}', space=sflag, size = 0x4, scoped, tag = 'scoped memory for tpu_custom_call.1']
    #allocation9 [shape = 'u8[8192]{0}', space=vmem, size = 0x2000, scoped, tag = 'input window, operand 2, single buffered']
    #allocation10 [shape = 'u8[8192]{0}', space=vmem, size = 0x2000, scoped, tag = 'input window, operand 7, single buffered']
    #allocation11 [shape = 's32[1]{0}', space=sflag, size = 0x4, scoped, tag = 'scoped memory for tpu_custom_call.1']
    #allocation12 [shape = 'u8[8192]{0}', space=vmem, size = 0x2000, scoped, tag = 'input window, operand 12, single buffered']
    #allocation13 [shape = 'u8[16384]{0}', space=vmem, size = 0x4000, scoped, tag = 'input window, operand 14, single buffered']
    #allocation14 [shape = 's32[1]{0}', space=sflag, size = 0x4, scoped, tag = 'scoped memory for tpu_custom_call.1']
    #allocation15 [shape = 'u8[16384]{0}', space=vmem, size = 0x4000, scoped, tag = 'input window, operand 16, single buffered']
    #allocation16 [shape = 'u8[4096]{0}', space=vmem, size = 0x1000, scoped, tag = 'output window, operand 0, single buffered']
    #allocation17 [shape = 'u8[4096]{0}', space=vmem, size = 0x1000, scoped, tag = 'output window, operand 1, single buffered']
    #allocation18 [shape = 's32[1]{0}', space=sflag, size = 0x4, scoped, tag = 'scoped memory for tpu_custom_call.1']
    #allocation19 [shape = 'u8[4096]{0}', space=vmem, size = 0x1000, scoped, tag = 'output window, operand 2, single buffered']
    #allocation20 [shape = 'u8[4096]{0}', space=vmem, size = 0x1000, scoped, tag = 'output window, operand 3, single buffered']
    #allocation21 [shape = 's32[1]{0}', space=sflag, size = 0x4, scoped, tag = 'scoped memory for tpu_custom_call.1']
    %28 = vsyncpa [#allocation5], 0
    %29 = vsyncpa [#allocation8], 0
    %30 = vsyncpa [#allocation11], 0
    %31 = vsyncpa [#allocation14], 0
    %32 = vsyncpa [#allocation6], 0
    %33 = vsyncpa [#allocation18], 0
    %34 = vsyncpa [#allocation21], 0
    // Predicated region
    $region2: #{tpu_custom_call.1} parent=1 // pred_check
      _
    $region3: #{tpu_custom_call.1} parent=1 // pred_check_branch
      %36 = sbr.rel (0) target = $region5
    $region4: #{tpu_custom_call.1} parent=1 // pred_region
      %38 = vsyncadd [#allocation5], 0
      %s40 = sshll.u32 %s0, 4
      %s41 = int_to_ptr.hbm [resolvable:$true] %s40
      %s42 = sshll.u32 [#allocation4], 4
      %s43 = int_to_ptr.vmem [resolvable:$true] %s42
      %45 = dma.hbm_to_vmem [thread:$0]  %s41, 128, %s43, [#allocation5]
    $region5: #{tpu_custom_call.1} parent=1 // pred_fallthru
      _
    // Predicated region
    $region6: #{tpu_custom_call.1} parent=1 // pred_check
      _
    $region7: #{tpu_custom_call.1} parent=1 // pred_check_branch
      %47 = sbr.rel (0) target = $region9
    $region8: #{tpu_custom_call.1} parent=1 // pred_region
      %49 = vsyncadd [#allocation8], 0
      %s51 = sshll.u32 %s1, 4
      %s52 = int_to_ptr.hbm [resolvable:$true] %s51
      %s53 = sshll.u32 [#allocation7], 4
      %s54 = int_to_ptr.vmem [resolvable:$true] %s53
      %56 = dma.hbm_to_vmem [thread:$0]  %s52, 128, %s54, [#allocation8]
    $region9: #{tpu_custom_call.1} parent=1 // pred_fallthru
      _
    // Predicated region
    $region10: #{tpu_custom_call.1} parent=1 // pred_check
      _
    $region11: #{tpu_custom_call.1} parent=1 // pred_check_branch
      %58 = sbr.rel (0) target = $region13
    $region12: #{tpu_custom_call.1} parent=1 // pred_region
      %60 = vsyncadd [#allocation8], 0
      %s61 = sshll.u32 %s2, 4
      %s62 = int_to_ptr.hbm [resolvable:$true] %s61
      %s63 = sshll.u32 [#allocation9], 4
      %s64 = int_to_ptr.vmem [resolvable:$true] %s63
      %69 = dma.hbm_to_vmem [thread:$0]  %s62, 256, %s64, [#allocation8], 128, 128, 8
    $region13: #{tpu_custom_call.1} parent=1 // pred_fallthru
      _
    // Predicated region
    $region14: #{tpu_custom_call.1} parent=1 // pred_check
      _
    $region15: #{tpu_custom_call.1} parent=1 // pred_check_branch
      %71 = sbr.rel (0) target = $region17
    $region16: #{tpu_custom_call.1} parent=1 // pred_region
      _
    $region17: #{tpu_custom_call.1} parent=1 // pred_fallthru
      _
    // Predicated region
    $region18: #{tpu_custom_call.1} parent=1 // pred_check
      _
    $region19: #{tpu_custom_call.1} parent=1 // pred_check_branch
      %73 = sbr.rel (0) target = $region21
    $region20: #{tpu_custom_call.1} parent=1 // pred_region
      _
    $region21: #{tpu_custom_call.1} parent=1 // pred_fallthru
      _
    // Predicated region
    $region22: #{tpu_custom_call.1} parent=1 // pred_check
      _
    $region23: #{tpu_custom_call.1} parent=1 // pred_check_branch
      %75 = sbr.rel (0) target = $region25
    $region24: #{tpu_custom_call.1} parent=1 // pred_region
      _
    $region25: #{tpu_custom_call.1} parent=1 // pred_fallthru
      _
    // Predicated region
    $region26: #{tpu_custom_call.1} parent=1 // pred_check
      _
    $region27: #{tpu_custom_call.1} parent=1 // pred_check_branch
      %77 = sbr.rel (0) target = $region29
    $region28: #{tpu_custom_call.1} parent=1 // pred_region
      _
    $region29: #{tpu_custom_call.1} parent=1 // pred_fallthru
      _
    // Predicated region
    $region30: #{tpu_custom_call.1} parent=1 // pred_check
      _
    $region31: #{tpu_custom_call.1} parent=1 // pred_check_branch
      %79 = sbr.rel (0) target = $region33
    $region32: #{tpu_custom_call.1} parent=1 // pred_region
      %81 = vsyncadd [#allocation11], 0
      %s82 = sshll.u32 %s7, 4
      %s83 = int_to_ptr.hbm [resolvable:$true] %s82
      %s84 = sshll.u32 [#allocation10], 4
      %s85 = int_to_ptr.vmem [resolvable:$true] %s84
      %90 = dma.hbm_to_vmem [thread:$0]  %s83, 256, %s85, [#allocation11], 128, 128, 8
    $region33: #{tpu_custom_call.1} parent=1 // pred_fallthru
      _
    // Predicated region
    $region34: #{tpu_custom_call.1} parent=1 // pred_check
      _
    $region35: #{tpu_custom_call.1} parent=1 // pred_check_branch
      %92 = sbr.rel (0) target = $region37
    $region36: #{tpu_custom_call.1} parent=1 // pred_region
      _
    $region37: #{tpu_custom_call.1} parent=1 // pred_fallthru
      _
    // Predicated region
    $region38: #{tpu_custom_call.1} parent=1 // pred_check
      _
    $region39: #{tpu_custom_call.1} parent=1 // pred_check_branch
      %94 = sbr.rel (0) target = $region41
    $region40: #{tpu_custom_call.1} parent=1 // pred_region
      _
    $region41: #{tpu_custom_call.1} parent=1 // pred_fallthru
      _
    // Predicated region
    $region42: #{tpu_custom_call.1} parent=1 // pred_check
      _
    $region43: #{tpu_custom_call.1} parent=1 // pred_check_branch
      %96 = sbr.rel (0) target = $region45
    $region44: #{tpu_custom_call.1} parent=1 // pred_region
      _
    $region45: #{tpu_custom_call.1} parent=1 // pred_fallthru
      _
    // Predicated region
    $region46: #{tpu_custom_call.1} parent=1 // pred_check
      _
    $region47: #{tpu_custom_call.1} parent=1 // pred_check_branch
      %98 = sbr.rel (0) target = $region49
    $region48: #{tpu_custom_call.1} parent=1 // pred_region
      _
    $region49: #{tpu_custom_call.1} parent=1 // pred_fallthru
      _
    // Predicated region
    $region50: #{tpu_custom_call.1} parent=1 // pred_check
      _
    $region51: #{tpu_custom_call.1} parent=1 // pred_check_branch
      %100 = sbr.rel (0) target = $region53
    $region52: #{tpu_custom_call.1} parent=1 // pred_region
      %102 = vsyncadd [#allocation11], 0
      %s103 = sshll.u32 %s12, 4
      %s104 = int_to_ptr.hbm [resolvable:$true] %s103
      %s105 = sshll.u32 [#allocation12], 4
      %s106 = int_to_ptr.vmem [resolvable:$true] %s105
      %111 = dma.hbm_to_vmem [thread:$0]  %s104, 256, %s106, [#allocation11], 128, 128, 8
    $region53: #{tpu_custom_call.1} parent=1 // pred_fallthru
      _
    // Predicated region
    $region54: #{tpu_custom_call.1} parent=1 // pred_check
      _
    $region55: #{tpu_custom_call.1} parent=1 // pred_check_branch
      %113 = sbr.rel (0) target = $region57
    $region56: #{tpu_custom_call.1} parent=1 // pred_region
      _
    $region57: #{tpu_custom_call.1} parent=1 // pred_fallthru
      _
    // Predicated region
    $region58: #{tpu_custom_call.1} parent=1 // pred_check
      _
    $region59: #{tpu_custom_call.1} parent=1 // pred_check_branch
      %115 = sbr.rel (0) target = $region61
    $region60: #{tpu_custom_call.1} parent=1 // pred_region
      %117 = vsyncadd [#allocation14], 0
      %s118 = sshll.u32 %s14, 4
      %s119 = int_to_ptr.hbm [resolvable:$true] %s118
      %s120 = sshll.u32 [#allocation13], 4
      %s121 = int_to_ptr.vmem [resolvable:$true] %s120
      %126 = dma.hbm_to_vmem [thread:$0]  %s119, 512, %s121, [#allocation14], 128, 128, 8
    $region61: #{tpu_custom_call.1} parent=1 // pred_fallthru
      _
    // Predicated region
    $region62: #{tpu_custom_call.1} parent=1 // pred_check
      _
    $region63: #{tpu_custom_call.1} parent=1 // pred_check_branch
      %128 = sbr.rel (0) target = $region65
    $region64: #{tpu_custom_call.1} parent=1 // pred_region
      _
    $region65: #{tpu_custom_call.1} parent=1 // pred_fallthru
      _
    // Predicated region
    $region66: #{tpu_custom_call.1} parent=1 // pred_check
      _
    $region67: #{tpu_custom_call.1} parent=1 // pred_check_branch
      %130 = sbr.rel (0) target = $region69
    $region68: #{tpu_custom_call.1} parent=1 // pred_region
      %132 = vsyncadd [#allocation14], 0
      %s133 = sshll.u32 %s16, 4
      %s134 = int_to_ptr.hbm [resolvable:$true] %s133
      %s135 = sshll.u32 [#allocation15], 4
      %s136 = int_to_ptr.vmem [resolvable:$true] %s135
      %141 = dma.hbm_to_vmem [thread:$0]  %s134, 512, %s136, [#allocation14], 128, 128, 8
    $region69: #{tpu_custom_call.1} parent=1 // pred_fallthru
      _
    // Predicated region
    $region70: #{tpu_custom_call.1} parent=1 // pred_check
      _
    $region71: #{tpu_custom_call.1} parent=1 // pred_check_branch
      %143 = sbr.rel (0) target = $region73
    $region72: #{tpu_custom_call.1} parent=1 // pred_region
      %145 = dma.done [#allocation5], 128
    $region73: #{tpu_custom_call.1} parent=1 // pred_fallthru
      _
    // Predicated region
    $region74: #{tpu_custom_call.1} parent=1 // pred_check
      _
    $region75: #{tpu_custom_call.1} parent=1 // pred_check_branch
      %147 = sbr.rel (0) target = $region77
    $region76: #{tpu_custom_call.1} parent=1 // pred_region
      %149 = dma.done [#allocation8], 128
    $region77: #{tpu_custom_call.1} parent=1 // pred_fallthru
      _
    // Predicated region
    $region78: #{tpu_custom_call.1} parent=1 // pred_check
      _
    $region79: #{tpu_custom_call.1} parent=1 // pred_check_branch
      %151 = sbr.rel (0) target = $region81
    $region80: #{tpu_custom_call.1} parent=1 // pred_region
      %153 = dma.done [#allocation8], 256
    $region81: #{tpu_custom_call.1} parent=1 // pred_fallthru
      _
    // Predicated region
    $region82: #{tpu_custom_call.1} parent=1 // pred_check
      _
    $region83: #{tpu_custom_call.1} parent=1 // pred_check_branch
      %155 = sbr.rel (0) target = $region85
    $region84: #{tpu_custom_call.1} parent=1 // pred_region
      %157 = dma.done [#allocation11], 256
    $region85: #{tpu_custom_call.1} parent=1 // pred_fallthru
      _
    // Predicated region
    $region86: #{tpu_custom_call.1} parent=1 // pred_check
      _
    $region87: #{tpu_custom_call.1} parent=1 // pred_check_branch
      %159 = sbr.rel (0) target = $region89
    $region88: #{tpu_custom_call.1} parent=1 // pred_region
      %161 = dma.done [#allocation11], 256
    $region89: #{tpu_custom_call.1} parent=1 // pred_fallthru
      _
    // Predicated region
    $region90: #{tpu_custom_call.1} parent=1 // pred_check
      _
    $region91: #{tpu_custom_call.1} parent=1 // pred_check_branch
      %163 = sbr.rel (0) target = $region93
    $region92: #{tpu_custom_call.1} parent=1 // pred_region
      %165 = dma.done [#allocation14], 512
    $region93: #{tpu_custom_call.1} parent=1 // pred_fallthru
      _
    // Predicated region
    $region94: #{tpu_custom_call.1} parent=1 // pred_check
      _
    $region95: #{tpu_custom_call.1} parent=1 // pred_check_branch
      %167 = sbr.rel (0) target = $region97
    $region96: #{tpu_custom_call.1} parent=1 // pred_region
      %169 = dma.done [#allocation14], 512
    $region97: #{tpu_custom_call.1} parent=1 // pred_fallthru
      _
    %v170 = vld [vmem:[#allocation4] sm:$0xff]
    %v171 = vld [vmem:[#allocation9] sm:$0xff]
    %v172 = vld [vmem:[#allocation9 + $0x8] sm:$0xff]
    %v173 = vld [vmem:[%s3] sm:$0x1]
    %v175 = vperm.slane %v173, 0
    %vm177 = vcmask 130048
    %v179 = vsel %vm177, %v170, 0
    %181 = vmatpush.msra.mxu0 0.0
    %182 = vmatpush.msra.mxu0 0.0
    %183 = vmatpush.msra.mxu0 0.0
    %184 = vmatpush.msra.mxu0 0.0
    %185 = vmatpush.msra.mxu0 0.0
    %186 = vmatpush.msra.mxu0 0.0
    %187 = vmatpush.msra.mxu0 0.0
    %188 = vmatpush.msra.mxu0 0.0
    %189 = vmatpush.msra.mxu0 0.0
    %190 = vmatpush.msra.mxu0 0.0
    %191 = vmatpush.msra.mxu0 0.0
    %192 = vmatpush.msra.mxu0 0.0
    %193 = vmatpush.msra.mxu0 0.0
    %194 = vmatpush.msra.mxu0 0.0
    %195 = vmatpush.msra.mxu0 %v172
    %196 = vmatpush.msra.mxu0 %v171
    %197 = vmatmul.f32.gmra.mxu0 %v179
    %v198 = vpop.f32.mrf.mxu0
    %v199 = vadd.f32 %v175, %v198
    %200 = vdwg.mxu0
    %s201 = sld [smem:[#allocation2]]
    %vm202 = vcmp.ge.f32.partialorder %v199, 0.0
    %v203 = vstv %s201
    %v204 = vmul.f32 %v203, %v199
    %v205 = vsel %vm202, %v199, %v204
    %v206 = vld [vmem:[%s5] sm:$0x1]
    %v207 = vld [vmem:[%s6] sm:$0x1]
    %vm208 = vcmask 261120
    %v209 = vsel %vm208, %v205, 0.0
    %210 = vadd.xlane.f32.xlu0 %v209
    %v211 = vpop.xlane.xlu0 %210
    %v212 = vrcp.pop 32.0
    %v213 = vmul.f32 32.0, %v212
    %v214 = vsub.f32 1.0, %v213
    %v215 = vmul.f32 %v212, %v214
    %v216 = vadd.f32 %v212, %v215
    %vm217 = vweird.f32 %v212
    %v218 = vsel %vm217, %v212, %v216
    %v219 = vmul.f32 %v211, %v218
    %v220 = vsub.f32 %v205, %v219
    %v221 = vmul.f32 %v220, %v220
    %v222 = vsel %vm208, %v221, 0.0
    %223 = vadd.xlane.f32.xlu0 %v222
    %v224 = vpop.xlane.xlu0 %223
    %v225 = vmul.f32 %v224, %v218
    %v226 = vadd.f32 %v225, 1e-05
    %v227 = vrsqrt.pop %v226
    %v228 = vmul.f32 %v227, %v226
    %v229 = vmul.f32 %v228, %v227
    %v230 = vmul.f32 0.5, %v229
    %v231 = vsub.f32 1.5, %v230
    %v232 = vmul.f32 %v227, %v231
    %vm233 = vweird.f32 %v226
    %vm234 = vweird.f32 %v227
    %vm235 = vmor %vm233, %vm234
    %v236 = vsel %vm235, %v227, %v232
    %v237 = vmul.f32 %v220, %v236
    %v239 = vperm.slane %v206, 0
    %v241 = vmul.f32 %v237, %v239
    %v243 = vperm.slane %v207, 0
    %v245 = vadd.f32 %v241, %v243
    %v246 = vld [vmem:[#allocation10] sm:$0xff]
    %v247 = vld [vmem:[#allocation10 + $0x8] sm:$0xff]
    %v248 = vld [vmem:[%s8] sm:$0x1]
    %v250 = vperm.slane %v248, 0
    %252 = vmatpush.msra.mxu0 0.0
    %253 = vmatpush.msra.mxu0 0.0
    %254 = vmatpush.msra.mxu0 0.0
    %255 = vmatpush.msra.mxu0 0.0
    %256 = vmatpush.msra.mxu0 0.0
    %257 = vmatpush.msra.mxu0 0.0
    %258 = vmatpush.msra.mxu0 0.0
    %259 = vmatpush.msra.mxu0 0.0
    %260 = vmatpush.msra.mxu0 0.0
    %261 = vmatpush.msra.mxu0 0.0
    %262 = vmatpush.msra.mxu0 0.0
    %263 = vmatpush.msra.mxu0 0.0
    %264 = vmatpush.msra.mxu0 0.0
    %265 = vmatpush.msra.mxu0 0.0
    %266 = vmatpush.msra.mxu0 %v247
    %267 = vmatpush.msra.mxu0 %v246
    %268 = vmatmul.f32.gmra.mxu0 %v179
    %v269 = vpop.f32.mrf.mxu0
    %v270 = vadd.f32 %v250, %v269
    %271 = vdwg.mxu0
    %s272 = sld [smem:[#allocation3]]
    %vm273 = vcmp.ge.f32.partialorder %v270, 0.0
    %v274 = vstv %s272
    %v275 = vmul.f32 %v274, %v270
    %v276 = vsel %vm273, %v270, %v275
    %v277 = vld [vmem:[%s10] sm:$0x1]
    %v278 = vld [vmem:[%s11] sm:$0x1]
    %v279 = vsel %vm208, %v276, 0.0
    %280 = vadd.xlane.f32.xlu0 %v279
    %v281 = vpop.xlane.xlu0 %280
    %v282 = vmul.f32 %v281, %v218
    %v283 = vsub.f32 %v276, %v282
    %v284 = vmul.f32 %v283, %v283
    %v285 = vsel %vm208, %v284, 0.0
    %286 = vadd.xlane.f32.xlu0 %v285
    %v287 = vpop.xlane.xlu0 %286
    %v288 = vmul.f32 %v287, %v218
    %v289 = vadd.f32 %v288, 1e-05
    %v290 = vrsqrt.pop %v289
    %v291 = vmul.f32 %v290, %v289
    %v292 = vmul.f32 %v291, %v290
    %v293 = vmul.f32 0.5, %v292
    %v294 = vsub.f32 1.5, %v293
    %v295 = vmul.f32 %v290, %v294
    %vm296 = vweird.f32 %v289
    %vm297 = vweird.f32 %v290
    %vm298 = vmor %vm296, %vm297
    %v299 = vsel %vm298, %v290, %v295
    %v300 = vmul.f32 %v283, %v299
    %v302 = vperm.slane %v277, 0
    %v304 = vmul.f32 %v300, %v302
    %v306 = vperm.slane %v278, 0
    %v308 = vadd.f32 %v304, %v306
    %v309 = vld [vmem:[#allocation7] sm:$0xff]
    %v310 = vld [vmem:[#allocation12] sm:$0xff]
    %v311 = vld [vmem:[#allocation12 + $0x8] sm:$0xff]
    %v313 = vsel %vm177, %v309, 0
    %315 = vmatpush.msra.mxu0 0.0
    %316 = vmatpush.msra.mxu0 0.0
    %317 = vmatpush.msra.mxu0 0.0
    %318 = vmatpush.msra.mxu0 0.0
    %319 = vmatpush.msra.mxu0 0.0
    %320 = vmatpush.msra.mxu0 0.0
    %321 = vmatpush.msra.mxu0 0.0
    %322 = vmatpush.msra.mxu0 0.0
    %323 = vmatpush.msra.mxu0 0.0
    %324 = vmatpush.msra.mxu0 0.0
    %325 = vmatpush.msra.mxu0 0.0
    %326 = vmatpush.msra.mxu0 0.0
    %327 = vmatpush.msra.mxu0 0.0
    %328 = vmatpush.msra.mxu0 0.0
    %329 = vmatpush.msra.mxu0 %v311
    %330 = vmatpush.msra.mxu0 %v310
    %331 = vmatmul.f32.gmra.mxu0 %v313
    %v332 = vpop.f32.mrf.mxu0
    %v333 = vadd.f32 0.0, %v332
    %334 = vdwg.mxu0
    %335 = vst.msk [vmem:[#allocation17] sm:$0xff] %vm208, %v333
    %v336 = vld [vmem:[%s13] sm:$0x1]
    %v338 = vperm.slane %v336, 0
    %v340 = vadd.f32 %v333, %v338
    %341 = vst.msk [vmem:[#allocation16] sm:$0xff] %vm208, %v340
    %v342 = vld [vmem:[#allocation13] sm:$0xff]
    %v343 = vld [vmem:[#allocation13 + $0x8] sm:$0xff]
    %v344 = vld [vmem:[#allocation13 + $0x10] sm:$0xff]
    %v345 = vld [vmem:[#allocation13 + $0x18] sm:$0xff]
    %v346 = vld [vmem:[%s15] sm:$0x1]
    %v348 = vperm.slane %v346, 0
    %v351 = vsel %vm208, %v245, 0
    %353 = vmatpush.msra.mxu0 0.0
    %354 = vmatpush.msra.mxu0 0.0
    %355 = vmatpush.msra.mxu0 0.0
    %356 = vmatpush.msra.mxu0 0.0
    %357 = vmatpush.msra.mxu0 0.0
    %358 = vmatpush.msra.mxu0 0.0
    %359 = vmatpush.msra.mxu0 0.0
    %360 = vmatpush.msra.mxu0 0.0
    %361 = vmatpush.msra.mxu0 0.0
    %362 = vmatpush.msra.mxu0 0.0
    %363 = vmatpush.msra.mxu0 0.0
    %364 = vmatpush.msra.mxu0 0.0
    %365 = vmatpush.msra.mxu0 %v345
    %366 = vmatpush.msra.mxu0 %v344
    %367 = vmatpush.msra.mxu0 %v343
    %368 = vmatpush.msra.mxu0 %v342
    %369 = vmatmul.f32.gmra.mxu0 %v351
    %v370 = vpop.f32.mrf.mxu0
    %v371 = vadd.f32 %v348, %v370
    %372 = vdwg.mxu0
    %vm373 = vcmask 785408
    %374 = vst.msk [vmem:[#allocation19] sm:$0xff] %vm373, %v371
    %v375 = vld [vmem:[#allocation15] sm:$0xff]
    %v376 = vld [vmem:[#allocation15 + $0x8] sm:$0xff]
    %v377 = vld [vmem:[#allocation15 + $0x10] sm:$0xff]
    %v378 = vld [vmem:[#allocation15 + $0x18] sm:$0xff]
    %v380 = vsel %vm208, %v308, 0
    %382 = vmatpush.msra.mxu0 0.0
    %383 = vmatpush.msra.mxu0 0.0
    %384 = vmatpush.msra.mxu0 0.0
    %385 = vmatpush.msra.mxu0 0.0
    %386 = vmatpush.msra.mxu0 0.0
    %387 = vmatpush.msra.mxu0 0.0
    %388 = vmatpush.msra.mxu0 0.0
    %389 = vmatpush.msra.mxu0 0.0
    %390 = vmatpush.msra.mxu0 0.0
    %391 = vmatpush.msra.mxu0 0.0
    %392 = vmatpush.msra.mxu0 0.0
    %393 = vmatpush.msra.mxu0 0.0
    %394 = vmatpush.msra.mxu0 %v378
    %395 = vmatpush.msra.mxu0 %v377
    %396 = vmatpush.msra.mxu0 %v376
    %397 = vmatpush.msra.mxu0 %v375
    %398 = vmatmul.f32.gmra.mxu0 %v380
    %v399 = vpop.f32.mrf.mxu0
    %v400 = vadd.f32 0.0, %v399
    %401 = vdwg.mxu0
    %402 = vst.msk [vmem:[#allocation20] sm:$0xff] %vm373, %v400
    // Predicated region
    $region98: #{tpu_custom_call.1} parent=1 // pred_check
      _
    $region99: #{tpu_custom_call.1} parent=1 // pred_check_branch
      %404 = sbr.rel (0) target = $region101
    $region100: #{tpu_custom_call.1} parent=1 // pred_region
      %406 = vsyncadd [#allocation6], 0
      %s408 = sshll.u32 [#allocation16], 4
      %s409 = int_to_ptr.vmem [resolvable:$true] %s408
      %s410 = sshll.u32 %s17, 4
      %s411 = int_to_ptr.hbm [resolvable:$true] %s410
      %413 = dma.vmem_to_hbm [thread:$0]  %s409, 128, %s411, [#allocation6]
    $region101: #{tpu_custom_call.1} parent=1 // pred_fallthru
      _
    // Predicated region
    $region102: #{tpu_custom_call.1} parent=1 // pred_check
      _
    $region103: #{tpu_custom_call.1} parent=1 // pred_check_branch
      %415 = sbr.rel (0) target = $region105
    $region104: #{tpu_custom_call.1} parent=1 // pred_region
      %417 = vsyncadd [#allocation18], 0
      %s419 = sshll.u32 [#allocation17], 4
      %s420 = int_to_ptr.vmem [resolvable:$true] %s419
      %s421 = sshll.u32 %s18, 4
      %s422 = int_to_ptr.hbm [resolvable:$true] %s421
      %424 = dma.vmem_to_hbm [thread:$0]  %s420, 128, %s422, [#allocation18]
    $region105: #{tpu_custom_call.1} parent=1 // pred_fallthru
      _
    // Predicated region
    $region106: #{tpu_custom_call.1} parent=1 // pred_check
      _
    $region107: #{tpu_custom_call.1} parent=1 // pred_check_branch
      %426 = sbr.rel (0) target = $region109
    $region108: #{tpu_custom_call.1} parent=1 // pred_region
      %428 = vsyncadd [#allocation18], 0
      %s430 = sshll.u32 [#allocation19], 4
      %s431 = int_to_ptr.vmem [resolvable:$true] %s430
      %s432 = sshll.u32 %s19, 4
      %s433 = int_to_ptr.hbm [resolvable:$true] %s432
      %435 = dma.vmem_to_hbm [thread:$0]  %s431, 128, %s433, [#allocation18]
    $region109: #{tpu_custom_call.1} parent=1 // pred_fallthru
      _
    // Predicated region
    $region110: #{tpu_custom_call.1} parent=1 // pred_check
      _
    $region111: #{tpu_custom_call.1} parent=1 // pred_check_branch
      %437 = sbr.rel (0) target = $region113
    $region112: #{tpu_custom_call.1} parent=1 // pred_region
      %439 = vsyncadd [#allocation21], 0
      %s441 = sshll.u32 [#allocation20], 4
      %s442 = int_to_ptr.vmem [resolvable:$true] %s441
      %s443 = sshll.u32 %s20, 4
      %s444 = int_to_ptr.hbm [resolvable:$true] %s443
      %446 = dma.vmem_to_hbm [thread:$0]  %s442, 128, %s444, [#allocation21]
    $region113: #{tpu_custom_call.1} parent=1 // pred_fallthru
      _
    // Predicated region
    $region114: #{tpu_custom_call.1} parent=1 // pred_check
      _
    $region115: #{tpu_custom_call.1} parent=1 // pred_check_branch
      %448 = sbr.rel (0) target = $region117
    $region116: #{tpu_custom_call.1} parent=1 // pred_region
      %450 = dma.done [#allocation6], 128
    $region117: #{tpu_custom_call.1} parent=1 // pred_fallthru
      _
    // Predicated region
    $region118: #{tpu_custom_call.1} parent=1 // pred_check
      _
    $region119: #{tpu_custom_call.1} parent=1 // pred_check_branch
      %452 = sbr.rel (0) target = $region121
    $region120: #{tpu_custom_call.1} parent=1 // pred_region
      %454 = dma.done [#allocation18], 128
    $region121: #{tpu_custom_call.1} parent=1 // pred_fallthru
      _
    // Predicated region
    $region122: #{tpu_custom_call.1} parent=1 // pred_check
      _
    $region123: #{tpu_custom_call.1} parent=1 // pred_check_branch
      %456 = sbr.rel (0) target = $region125
    $region124: #{tpu_custom_call.1} parent=1 // pred_region
      %458 = dma.done [#allocation18], 128
    $region125: #{tpu_custom_call.1} parent=1 // pred_fallthru
      _
    // Predicated region
    $region126: #{tpu_custom_call.1} parent=1 // pred_check
      _
    $region127: #{tpu_custom_call.1} parent=1 // pred_check_branch
      %460 = sbr.rel (0) target = $region129
    $region128: #{tpu_custom_call.1} parent=1 // pred_region
      %462 = dma.done [#allocation21], 128
    $region129: #{tpu_custom_call.1} parent=1 // pred_fallthru
      _
    %463 = vsyncpa [#allocation5], 1
    %464 = vsyncpa [#allocation8], 1
    %465 = vsyncpa [#allocation11], 1
    %466 = vsyncpa [#allocation14], 1
    %467 = vsyncpa [#allocation6], 1
    %468 = vsyncpa [#allocation18], 1
    %469 = vsyncpa [#allocation21], 1

</llo_original>
